<compile_context>
chip_gen: v7x
topology: tpu7x:2x2x1
jax: 0.10.0
libtpu: 0.0.40
codegen_flags: <defaults>
</compile_context>

<pallas_src>
import math

import jax
import jax.numpy as jnp
from jax.experimental import pallas as pl
from jax.experimental.pallas import tpu as pltpu


HIDDEN = 100   # logical hidden size of the PyTorch module
H_PAD = 128    # lane-padded hidden size (multiple of 128)
DROP_P = 0.4


def _round_up(n, m):
    return ((n + m - 1) // m) * m


# --------------------------- kernels ---------------------------

def _block_forward(x, mask, w1, b1, w2, b2):
    """x:(tb,Hp)  mask:None or (tb,Hp) pre-scaled dropout  w*: (Hp,Hp)  b*: (1,Hp)."""
    h = jnp.dot(x, w1, preferred_element_type=jnp.float32) + b1
    h = jnp.maximum(h, 0.0)
    if mask is not None:
        h = h * mask                      # mask already holds 0 or 1/(1-p)
    y = jnp.dot(h, w2, preferred_element_type=jnp.float32) + b2
    return x + y


def residual_kernel_drop(x_ref, mask_ref, w1_ref, b1_ref, w2_ref, b2_ref, o_ref):
    o_ref[...] = _block_forward(x_ref[...], mask_ref[...], w1_ref[...],
                                b1_ref[...], w2_ref[...], b2_ref[...])


def residual_kernel_nodrop(x_ref, w1_ref, b1_ref, w2_ref, b2_ref, o_ref):
    o_ref[...] = _block_forward(x_ref[...], None, w1_ref[...],
                                b1_ref[...], w2_ref[...], b2_ref[...])


# --------------------------- wrapper ---------------------------

def dropout_scale_mask(key, shape, p=DROP_P):
    """Inverted-dropout mask, pre-scaled: 1/(1-p) with prob (1-p), else 0."""
    keep = jax.random.bernoulli(key, 1.0 - p, shape)
    return keep.astype(jnp.float32) * (1.0 / (1.0 - p))


def _pad2(a, rows, cols):
    return jnp.pad(a, ((0, rows - a.shape[0]), (0, cols - a.shape[1])))


def residual_forward(x, w1_t, b1, w2_t, b2, *, drop=True, rng_key=None,
                     row_tile=128):
    """x:(B,100)  w*_t:(100,100) pre-transposed (in,out)  b*:(100,)."""
    B, H = x.shape
    assert H == HIDDEN

    tb = min(row_tile, _round_up(B, 8))       # row tile, multiple of 8
    b_pad = _round_up(B, tb)

    x_p = _pad2(x.astype(jnp.float32), b_pad, H_PAD)
    w1_p = _pad2(w1_t.astype(jnp.float32), H_PAD, H_PAD)
    w2_p = _pad2(w2_t.astype(jnp.float32), H_PAD, H_PAD)
    b1_p = _pad2(b1.reshape(1, -1).astype(jnp.float32), 1, H_PAD)
    b2_p = _pad2(b2.reshape(1, -1).astype(jnp.float32), 1, H_PAD)

    grid = (b_pad // tb,)
    row_spec = pl.BlockSpec((tb, H_PAD), lambda i: (i, 0))    # streamed per tile
    w_spec = pl.BlockSpec((H_PAD, H_PAD), lambda i: (0, 0))   # VMEM-resident
    b_spec = pl.BlockSpec((1, H_PAD), lambda i: (0, 0))       # VMEM-resident

    compiler_params = None
    if jax.default_backend() == "tpu":
        compiler_params = pltpu.CompilerParams(
            dimension_semantics=("parallel",))   # split row tiles across TCs (v7x)

    if drop:
        if rng_key is None:
            rng_key = jax.random.PRNGKey(0)
        mask = dropout_scale_mask(rng_key, (b_pad, H_PAD))
        out = pl.pallas_call(
            residual_kernel_drop,
            out_shape=jax.ShapeDtypeStruct((b_pad, H_PAD), jnp.float32),
            grid=grid,
            in_specs=[row_spec, row_spec, w_spec, b_spec, w_spec, b_spec],
            out_specs=row_spec,
            compiler_params=compiler_params,
        )(x_p, mask, w1_p, b1_p, w2_p, b2_p)
    else:
        out = pl.pallas_call(
            residual_kernel_nodrop,
            out_shape=jax.ShapeDtypeStruct((b_pad, H_PAD), jnp.float32),
            grid=grid,
            in_specs=[row_spec, w_spec, b_spec, w_spec, b_spec],
            out_specs=row_spec,
            compiler_params=compiler_params,
        )(x_p, w1_p, b1_p, w2_p, b2_p)

    return out[:B, :HIDDEN]


def init_params(key, hidden):
    """Deterministic init mimicking nn.Linear's default (uniform +/- 1/sqrt(in))."""
    k1, k2, k3, k4 = jax.random.split(key, 4)
    bound = 1.0 / math.sqrt(hidden)
    w1 = jax.random.uniform(k1, (hidden, hidden), jnp.float32, -bound, bound)
    b1 = jax.random.uniform(k2, (hidden,), jnp.float32, -bound, bound)
    w2 = jax.random.uniform(k3, (hidden, hidden), jnp.float32, -bound, bound)
    b2 = jax.random.uniform(k4, (hidden,), jnp.float32, -bound, bound)
    # pre-transpose so the kernel computes x @ W^T as x @ w_t
    return w1.T, b1, w2.T, b2


if __name__ == "__main__":
    key = jax.random.PRNGKey(0)
    k_param, k_x, k_drop = jax.random.split(key, 3)

    B = 8
    w1_t, b1, w2_t, b2 = init_params(k_param, HIDDEN)
    x = jax.random.normal(k_x, (B, HIDDEN), jnp.float32)

    # ---- deterministic (no-dropout) path vs pure-JAX reference ----
    out_nodrop = jax.block_until_ready(
        residual_forward(x, w1_t, b1, w2_t, b2, drop=False))
    ref_nodrop = x + (jnp.maximum(x @ w1_t + b1, 0.0) @ w2_t + b2)
    assert out_nodrop.shape == (B, HIDDEN) and out_nodrop.dtype == jnp.float32
    assert bool(jnp.allclose(out_nodrop, ref_nodrop, atol=1e-4, rtol=1e-4))

    # ---- dropout path (train mode): reproduce the same mask host-side ----
    out_drop = jax.block_until_ready(
        residual_forward(x, w1_t, b1, w2_t, b2, drop=True, rng_key=k_drop))
    b_pad = _round_up(B, 8)
    mask = dropout_scale_mask(k_drop, (b_pad, H_PAD))[:B, :HIDDEN]
    h_ref = jnp.maximum(x @ w1_t + b1, 0.0) * mask
    ref_drop = x + (h_ref @ w2_t + b2)
    assert out_drop.shape == (B, HIDDEN)
    assert bool(jnp.all(jnp.isfinite(out_drop)))
    assert bool(jnp.allclose(out_drop, ref_drop, atol=1e-4, rtol=1e-4))

    print("KERNEL_OK")
</pallas_src>

<mosaic_0001>
module attributes {stable_mosaic.version = 11 : i64} {
  func.func @residual_kernel_nodrop(%arg0: i32, %arg1: memref<8x128xf32, #tpu.memory_space<vmem>>, %arg2: memref<128x128xf32, #tpu.memory_space<vmem>>, %arg3: memref<1x128xf32, #tpu.memory_space<vmem>>, %arg4: memref<128x128xf32, #tpu.memory_space<vmem>>, %arg5: memref<1x128xf32, #tpu.memory_space<vmem>>, %arg6: memref<8x128xf32, #tpu.memory_space<vmem>>) attributes {dimension_semantics = [#tpu.dimension_semantics<arbitrary>], iteration_bounds = array<i64: 1>, scalar_prefetch = 0 : i64, scratch_operands = 0 : i64, tpu.core_type = #tpu.core_type<tc>, window_params = [{transform_indices = @transform_0, window_bounds = array<i64: 8, 128>}, {pipeline_mode = #tpu.pipeline_mode<synchronous>, transform_indices = @transform_1, window_bounds = array<i64: 128, 128>}, {pipeline_mode = #tpu.pipeline_mode<synchronous>, transform_indices = @transform_2, window_bounds = array<i64: 1, 128>}, {pipeline_mode = #tpu.pipeline_mode<synchronous>, transform_indices = @transform_3, window_bounds = array<i64: 128, 128>}, {pipeline_mode = #tpu.pipeline_mode<synchronous>, transform_indices = @transform_4, window_bounds = array<i64: 1, 128>}, {transform_indices = @transform_5, window_bounds = array<i64: 8, 128>}]} {
    %c0 = arith.constant 0 : index
    %c0_0 = arith.constant 0 : index
    %0 = vector.load %arg1[%c0, %c0_0] : memref<8x128xf32, #tpu.memory_space<vmem>>, vector<8x128xf32>
    %c0_1 = arith.constant 0 : index
    %c0_2 = arith.constant 0 : index
    %1 = vector.load %arg2[%c0_1, %c0_2] : memref<128x128xf32, #tpu.memory_space<vmem>>, vector<128x128xf32>
    %c0_3 = arith.constant 0 : index
    %c0_4 = arith.constant 0 : index
    %2 = vector.load %arg3[%c0_3, %c0_4] : memref<1x128xf32, #tpu.memory_space<vmem>>, vector<1x128xf32>
    %c0_5 = arith.constant 0 : index
    %c0_6 = arith.constant 0 : index
    %3 = vector.load %arg4[%c0_5, %c0_6] : memref<128x128xf32, #tpu.memory_space<vmem>>, vector<128x128xf32>
    %c0_7 = arith.constant 0 : index
    %c0_8 = arith.constant 0 : index
    %4 = vector.load %arg5[%c0_7, %c0_8] : memref<1x128xf32, #tpu.memory_space<vmem>>, vector<1x128xf32>
    %cst = arith.constant dense<0.000000e+00> : vector<8x128xf32>
    %5 = tpu.matmul %0, %1, %cst {dimension_numbers = #tpu.dot_dimension_numbers<[1], [0], [0], [1], [0, 0, 1, 1], [], []>} : vector<8x128xf32>, vector<128x128xf32>, vector<8x128xf32> -> vector<8x128xf32>
    %6 = vector.broadcast %2 : vector<1x128xf32> to vector<8x128xf32>
    %7 = arith.addf %5, %6 : vector<8x128xf32>
    %cst_9 = arith.constant 0.000000e+00 : f32
    %8 = vector.broadcast %cst_9 : f32 to vector<8x128xf32>
    %9 = arith.maximumf %7, %8 : vector<8x128xf32>
    %cst_10 = arith.constant dense<0.000000e+00> : vector<8x128xf32>
    %10 = tpu.matmul %9, %3, %cst_10 {dimension_numbers = #tpu.dot_dimension_numbers<[1], [0], [0], [1], [0, 0, 1, 1], [], []>} : vector<8x128xf32>, vector<128x128xf32>, vector<8x128xf32> -> vector<8x128xf32>
    %11 = vector.broadcast %4 : vector<1x128xf32> to vector<8x128xf32>
    %12 = arith.addf %10, %11 : vector<8x128xf32>
    %13 = arith.addf %0, %12 : vector<8x128xf32>
    %c0_11 = arith.constant 0 : index
    %c0_12 = arith.constant 0 : index
    %14 = vector.load %arg6[%c0_11, %c0_12] : memref<8x128xf32, #tpu.memory_space<vmem>>, vector<8x128xf32>
    tpu.vector_store %arg6[%c0_11, %c0_12], %13 {strides = array<i32>} : memref<8x128xf32, #tpu.memory_space<vmem>>, vector<8x128xf32>,
    return
  }
  func.func @transform_0(%arg0: i32) -> (i32, i32) {
    %c0_i32 = arith.constant 0 : i32
    %c0_i32_0 = arith.constant 0 : i32
    return %arg0, %c0_i32 : i32, i32
  }
  func.func @transform_1(%arg0: i32) -> (i32, i32) {
    %c0_i32 = arith.constant 0 : i32
    %c0_i32_0 = arith.constant 0 : i32
    %c0_i32_1 = arith.constant 0 : i32
    return %c0_i32, %c0_i32_0 : i32, i32
  }
  func.func @transform_2(%arg0: i32) -> (i32, i32) {
    %c0_i32 = arith.constant 0 : i32
    %c0_i32_0 = arith.constant 0 : i32
    %c0_i32_1 = arith.constant 0 : i32
    return %c0_i32, %c0_i32_0 : i32, i32
  }
  func.func @transform_3(%arg0: i32) -> (i32, i32) {
    %c0_i32 = arith.constant 0 : i32
    %c0_i32_0 = arith.constant 0 : i32
    %c0_i32_1 = arith.constant 0 : i32
    return %c0_i32, %c0_i32_0 : i32, i32
  }
  func.func @transform_4(%arg0: i32) -> (i32, i32) {
    %c0_i32 = arith.constant 0 : i32
    %c0_i32_0 = arith.constant 0 : i32
    %c0_i32_1 = arith.constant 0 : i32
    return %c0_i32, %c0_i32_0 : i32, i32
  }
  func.func @transform_5(%arg0: i32) -> (i32, i32) {
    %c0_i32 = arith.constant 0 : i32
    %c0_i32_0 = arith.constant 0 : i32
    return %arg0, %c0_i32 : i32, i32
  }
}

</mosaic_0001>

<llo_original>
// kernel: tpu_custom_call.1
$region0: #{tpu_custom_call.1}
  #allocation0 [shape = 'u32[]', space=smem, size = 0x4, offset = 0x4, fixed_abs, tag = 'smem constant byte address 0x4 - core index']
  #allocation1 [shape = 'u32[144,128]{1,0:T(1,128)}', space=vmem, size = 0x12000, scoped, tag = 'internal scratch']
  %s0 = inlined_call_operand.hbm [shape: f32[8,128], index: 0, kind: input, shape index: {}]
  %s1 = inlined_call_operand.hbm [shape: f32[128,128], index: 1, kind: input, shape index: {}]
  %s2 = inlined_call_operand.vmem [shape: f32[1,128], index: 2, kind: input, shape index: {}]
  %s3 = inlined_call_operand.hbm [shape: f32[128,128], index: 3, kind: input, shape index: {}]
  %s4 = inlined_call_operand.vmem [shape: f32[1,128], index: 4, kind: input, shape index: {}]
  %s5 = inlined_call_operand.hbm [shape: f32[8,128], index: 5, kind: output, shape index: {}]
  %s6 = sld [smem:[#allocation0]]
  $region42: #{tpu_custom_call.1} parent=0
    _
  %s8 = ssub.s32 1, %s6
  %s9 = scalar_select 0, %s8, %s6
  $region1: #{tpu_custom_call.1} parent=0
    #allocation2 [shape = 'u8[4096]{0}', space=vmem, size = 0x1000, scoped, tag = 'input window, operand 0, single buffered']
    #allocation3 [shape = 's32[1]{0}', space=sflag, size = 0x4, scoped, tag = 'scoped memory for tpu_custom_call.1']
    #allocation4 [shape = 's32[1]{0}', space=sflag, size = 0x4, scoped, tag = 'scoped memory for tpu_custom_call.1']
    #allocation5 [shape = 'u8[65536]{0}', space=vmem, size = 0x10000, scoped, tag = 'input window, operand 1, single buffered']
    #allocation6 [shape = 's32[1]{0}', space=sflag, size = 0x4, scoped, tag = 'scoped memory for tpu_custom_call.1']
    #allocation7 [shape = 'u8[65536]{0}', space=vmem, size = 0x10000, scoped, tag = 'input window, operand 3, single buffered']
    #allocation8 [shape = 'u8[4096]{0}', space=vmem, size = 0x1000, scoped, tag = 'output window, operand 0, single buffered']
    %10 = vsyncpa [#allocation3], 0
    %11 = vsyncpa [#allocation6], 0
    %12 = vsyncpa [#allocation4], 0
    // Predicated region
    $region2: #{tpu_custom_call.1} parent=1 // pred_check
      _
    $region3: #{tpu_custom_call.1} parent=1 // pred_check_branch
      %14 = sbr.rel (0) target = $region5
    $region4: #{tpu_custom_call.1} parent=1 // pred_region
      %s16 = ssub.s32 128, 128
      %17 = vsyncadd [#allocation3], %s16
      %s19 = sshll.u32 [#allocation2], 4
      %s20 = int_to_ptr.vmem [resolvable:$true] %s19
      %22 = dma.hbm_to_vmem [thread:$0]  %s0, 128, %s20, [#allocation3]
    $region5: #{tpu_custom_call.1} parent=1 // pred_fallthru
      _
    // Predicated region
    $region6: #{tpu_custom_call.1} parent=1 // pred_check
      _
    $region7: #{tpu_custom_call.1} parent=1 // pred_check_branch
      %24 = sbr.rel (0) target = $region9
    $region8: #{tpu_custom_call.1} parent=1 // pred_region
      %s26 = ssub.s32 2048, 2048
      %27 = vsyncadd [#allocation6], %s26
      %s28 = sshll.u32 [#allocation5], 4
      %s29 = int_to_ptr.vmem [resolvable:$true] %s28
      %34 = dma.hbm_to_vmem [thread:$0]  %s1, 2048, %s29, [#allocation6], 128, 128, 8
    $region9: #{tpu_custom_call.1} parent=1 // pred_fallthru
      _
    // Predicated region
    $region10: #{tpu_custom_call.1} parent=1 // pred_check
      _
    $region11: #{tpu_custom_call.1} parent=1 // pred_check_branch
      %36 = sbr.rel (0) target = $region13
    $region12: #{tpu_custom_call.1} parent=1 // pred_region
      _
    $region13: #{tpu_custom_call.1} parent=1 // pred_fallthru
      _
    // Predicated region
    $region14: #{tpu_custom_call.1} parent=1 // pred_check
      _
    $region15: #{tpu_custom_call.1} parent=1 // pred_check_branch
      %38 = sbr.rel (0) target = $region17
    $region16: #{tpu_custom_call.1} parent=1 // pred_region
      %s40 = ssub.s32 2048, 2048
      %41 = vsyncadd [#allocation6], %s40
      %s42 = sshll.u32 [#allocation7], 4
      %s43 = int_to_ptr.vmem [resolvable:$true] %s42
      %48 = dma.hbm_to_vmem [thread:$0]  %s3, 2048, %s43, [#allocation6], 128, 128, 8
    $region17: #{tpu_custom_call.1} parent=1 // pred_fallthru
      _
    // Predicated region
    $region18: #{tpu_custom_call.1} parent=1 // pred_check
      _
    $region19: #{tpu_custom_call.1} parent=1 // pred_check_branch
      %50 = sbr.rel (0) target = $region21
    $region20: #{tpu_custom_call.1} parent=1 // pred_region
      _
    $region21: #{tpu_custom_call.1} parent=1 // pred_fallthru
      _
    // Predicated region
    $region22: #{tpu_custom_call.1} parent=1 // pred_check
      _
    $region23: #{tpu_custom_call.1} parent=1 // pred_check_branch
      %52 = sbr.rel (0) target = $region25
    $region24: #{tpu_custom_call.1} parent=1 // pred_region
      %53 = dma.done [#allocation3], 128
    $region25: #{tpu_custom_call.1} parent=1 // pred_fallthru
      _
    // Predicated region
    $region26: #{tpu_custom_call.1} parent=1 // pred_check
      _
    $region27: #{tpu_custom_call.1} parent=1 // pred_check_branch
      %55 = sbr.rel (0) target = $region29
    $region28: #{tpu_custom_call.1} parent=1 // pred_region
      %56 = dma.done [#allocation6], 2048
    $region29: #{tpu_custom_call.1} parent=1 // pred_fallthru
      _
    // Predicated region
    $region30: #{tpu_custom_call.1} parent=1 // pred_check
      _
    $region31: #{tpu_custom_call.1} parent=1 // pred_check_branch
      %58 = sbr.rel (0) target = $region33
    $region32: #{tpu_custom_call.1} parent=1 // pred_region
      %59 = dma.done [#allocation6], 2048
    $region33: #{tpu_custom_call.1} parent=1 // pred_fallthru
      _
    %v60 = vld [vmem:[#allocation2] sm:$0xff]
    %v61 = vld [vmem:[#allocation5] sm:$0xff]
    %v62 = vld [vmem:[#allocation5 + $0x8] sm:$0xff]
    %v63 = vld [vmem:[#allocation5 + $0x10] sm:$0xff]
    %v64 = vld [vmem:[#allocation5 + $0x18] sm:$0xff]
    %v65 = vld [vmem:[#allocation5 + $0x20] sm:$0xff]
    %v66 = vld [vmem:[#allocation5 + $0x28] sm:$0xff]
    %v67 = vld [vmem:[#allocation5 + $0x30] sm:$0xff]
    %v68 = vld [vmem:[#allocation5 + $0x38] sm:$0xff]
    %v69 = vld [vmem:[#allocation5 + $0x40] sm:$0xff]
    %v70 = vld [vmem:[#allocation5 + $0x48] sm:$0xff]
    %v71 = vld [vmem:[#allocation5 + $0x50] sm:$0xff]
    %v72 = vld [vmem:[#allocation5 + $0x58] sm:$0xff]
    %v73 = vld [vmem:[#allocation5 + $0x60] sm:$0xff]
    %v74 = vld [vmem:[#allocation5 + $0x68] sm:$0xff]
    %v75 = vld [vmem:[#allocation5 + $0x70] sm:$0xff]
    %v76 = vld [vmem:[#allocation5 + $0x78] sm:$0xff]
    %v77 = vld [vmem:[%s2] sm:$0x1]
    %v78 = vld [vmem:[#allocation7] sm:$0xff]
    %v79 = vld [vmem:[#allocation7 + $0x8] sm:$0xff]
    %v80 = vld [vmem:[#allocation7 + $0x10] sm:$0xff]
    %v81 = vld [vmem:[#allocation7 + $0x18] sm:$0xff]
    %v82 = vld [vmem:[#allocation7 + $0x20] sm:$0xff]
    %v83 = vld [vmem:[#allocation7 + $0x28] sm:$0xff]
    %v84 = vld [vmem:[#allocation7 + $0x30] sm:$0xff]
    %v85 = vld [vmem:[#allocation7 + $0x38] sm:$0xff]
    %v86 = vld [vmem:[#allocation7 + $0x40] sm:$0xff]
    %v87 = vld [vmem:[#allocation7 + $0x48] sm:$0xff]
    %v88 = vld [vmem:[#allocation7 + $0x50] sm:$0xff]
    %v89 = vld [vmem:[#allocation7 + $0x58] sm:$0xff]
    %v90 = vld [vmem:[#allocation7 + $0x60] sm:$0xff]
    %v91 = vld [vmem:[#allocation7 + $0x68] sm:$0xff]
    %v92 = vld [vmem:[#allocation7 + $0x70] sm:$0xff]
    %v93 = vld [vmem:[#allocation7 + $0x78] sm:$0xff]
    %v94 = vld [vmem:[%s4] sm:$0x1]
    %v96 = vlaneseq
    %v97 = vshrl.u32 %v96, 7
    %v98 = vsub.s32 0, %v97
    %v99 = vrot.slane %v77, %v98
    %101 = vmatprep.subr.mxu0 0.0
    %102 = vmatpush1.msra.mxu0 %v61
    %103 = vmatprep.subr.mxu0 0.0
    %104 = vmatpush1.msra.mxu0 %v62
    %105 = vmatprep.subr.mxu0 0.0
    %106 = vmatpush1.msra.mxu0 %v63
    %107 = vmatprep.subr.mxu0 0.0
    %108 = vmatpush1.msra.mxu0 %v64
    %109 = vmatprep.subr.mxu0 0.0
    %110 = vmatpush1.msra.mxu0 %v65
    %111 = vmatprep.subr.mxu0 0.0
    %112 = vmatpush1.msra.mxu0 %v66
    %113 = vmatprep.subr.mxu0 0.0
    %114 = vmatpush1.msra.mxu0 %v67
    %115 = vmatprep.subr.mxu0 0.0
    %116 = vmatpush1.msra.mxu0 %v68
    %117 = vmatprep.subr.mxu0 0.0
    %118 = vmatpush1.msra.mxu0 %v69
    %119 = vmatprep.subr.mxu0 0.0
    %120 = vmatpush1.msra.mxu0 %v70
    %121 = vmatprep.subr.mxu0 0.0
    %122 = vmatpush1.msra.mxu0 %v71
    %123 = vmatprep.subr.mxu0 0.0
    %124 = vmatpush1.msra.mxu0 %v72
    %125 = vmatprep.subr.mxu0 0.0
    %126 = vmatpush1.msra.mxu0 %v73
    %127 = vmatprep.subr.mxu0 0.0
    %128 = vmatpush1.msra.mxu0 %v74
    %129 = vmatprep.subr.mxu0 0.0
    %130 = vmatpush1.msra.mxu0 %v75
    %131 = vmatprep.subr.mxu0 0.0
    %132 = vmatpush1.msra.mxu0 %v76
    %133 = vmatprep.subr.mxu0 0.0
    %134 = vmatpush1.msra.mxu0 0.0
    %135 = vmatprep.subr.mxu0 0.0
    %136 = vmatpush1.msra.mxu0 0.0
    %137 = vmatprep.subr.mxu0 0.0
    %138 = vmatpush1.msra.mxu0 0.0
    %139 = vmatprep.subr.mxu0 0.0
    %140 = vmatpush1.msra.mxu0 0.0
    %141 = vmatprep.subr.mxu0 0.0
    %142 = vmatpush1.msra.mxu0 0.0
    %143 = vmatprep.subr.mxu0 0.0
    %144 = vmatpush1.msra.mxu0 0.0
    %145 = vmatprep.subr.mxu0 0.0
    %146 = vmatpush1.msra.mxu0 0.0
    %147 = vmatprep.subr.mxu0 0.0
    %148 = vmatpush1.msra.mxu0 0.0
    %149 = vmatprep.subr.mxu0 0.0
    %150 = vmatpush1.msra.mxu0 0.0
    %151 = vmatprep.subr.mxu0 0.0
    %152 = vmatpush1.msra.mxu0 0.0
    %153 = vmatprep.subr.mxu0 0.0
    %154 = vmatpush1.msra.mxu0 0.0
    %155 = vmatprep.subr.mxu0 0.0
    %156 = vmatpush1.msra.mxu0 0.0
    %157 = vmatprep.subr.mxu0 0.0
    %158 = vmatpush1.msra.mxu0 0.0
    %159 = vmatprep.subr.mxu0 0.0
    %160 = vmatpush1.msra.mxu0 0.0
    %161 = vmatprep.subr.mxu0 0.0
    %162 = vmatpush1.msra.mxu0 0.0
    %163 = vmatprep.subr.mxu0 0.0
    %164 = vmatpush1.msra.mxu0 0.0
    %165 = vmatprep.mubr.f32.mxu0 0.0
    %166 = vmatmul.mubr.f32.gmra.mrb[0].mxu0 %v60
    %v167 = vpop.f32.mrb[0].mxu0
    %v168 = vadd.f32 %v99, %v167
    %v169 = vpop.f32.mrb[0].mxu0
    %170 = vdwg.mxu0
    %v171 = vmax.f32 %v168, 0.0
    %v173 = vlaneseq
    %v174 = vshrl.u32 %v173, 7
    %v175 = vsub.s32 0, %v174
    %v176 = vrot.slane %v94, %v175
    %178 = vmatprep.subr.mxu0 0.0
    %179 = vmatpush1.msra.mxu0 %v78
    %180 = vmatprep.subr.mxu0 0.0
    %181 = vmatpush1.msra.mxu0 %v79
    %182 = vmatprep.subr.mxu0 0.0
    %183 = vmatpush1.msra.mxu0 %v80
    %184 = vmatprep.subr.mxu0 0.0
    %185 = vmatpush1.msra.mxu0 %v81
    %186 = vmatprep.subr.mxu0 0.0
    %187 = vmatpush1.msra.mxu0 %v82
    %188 = vmatprep.subr.mxu0 0.0
    %189 = vmatpush1.msra.mxu0 %v83
    %190 = vmatprep.subr.mxu0 0.0
    %191 = vmatpush1.msra.mxu0 %v84
    %192 = vmatprep.subr.mxu0 0.0
    %193 = vmatpush1.msra.mxu0 %v85
    %194 = vmatprep.subr.mxu0 0.0
    %195 = vmatpush1.msra.mxu0 %v86
    %196 = vmatprep.subr.mxu0 0.0
    %197 = vmatpush1.msra.mxu0 %v87
    %198 = vmatprep.subr.mxu0 0.0
    %199 = vmatpush1.msra.mxu0 %v88
    %200 = vmatprep.subr.mxu0 0.0
    %201 = vmatpush1.msra.mxu0 %v89
    %202 = vmatprep.subr.mxu0 0.0
    %203 = vmatpush1.msra.mxu0 %v90
    %204 = vmatprep.subr.mxu0 0.0
    %205 = vmatpush1.msra.mxu0 %v91
    %206 = vmatprep.subr.mxu0 0.0
    %207 = vmatpush1.msra.mxu0 %v92
    %208 = vmatprep.subr.mxu0 0.0
    %209 = vmatpush1.msra.mxu0 %v93
    %210 = vmatprep.subr.mxu0 0.0
    %211 = vmatpush1.msra.mxu0 0.0
    %212 = vmatprep.subr.mxu0 0.0
    %213 = vmatpush1.msra.mxu0 0.0
    %214 = vmatprep.subr.mxu0 0.0
    %215 = vmatpush1.msra.mxu0 0.0
    %216 = vmatprep.subr.mxu0 0.0
    %217 = vmatpush1.msra.mxu0 0.0
    %218 = vmatprep.subr.mxu0 0.0
    %219 = vmatpush1.msra.mxu0 0.0
    %220 = vmatprep.subr.mxu0 0.0
    %221 = vmatpush1.msra.mxu0 0.0
    %222 = vmatprep.subr.mxu0 0.0
    %223 = vmatpush1.msra.mxu0 0.0
    %224 = vmatprep.subr.mxu0 0.0
    %225 = vmatpush1.msra.mxu0 0.0
    %226 = vmatprep.subr.mxu0 0.0
    %227 = vmatpush1.msra.mxu0 0.0
    %228 = vmatprep.subr.mxu0 0.0
    %229 = vmatpush1.msra.mxu0 0.0
    %230 = vmatprep.subr.mxu0 0.0
    %231 = vmatpush1.msra.mxu0 0.0
    %232 = vmatprep.subr.mxu0 0.0
    %233 = vmatpush1.msra.mxu0 0.0
    %234 = vmatprep.subr.mxu0 0.0
    %235 = vmatpush1.msra.mxu0 0.0
    %236 = vmatprep.subr.mxu0 0.0
    %237 = vmatpush1.msra.mxu0 0.0
    %238 = vmatprep.subr.mxu0 0.0
    %239 = vmatpush1.msra.mxu0 0.0
    %240 = vmatprep.subr.mxu0 0.0
    %241 = vmatpush1.msra.mxu0 0.0
    %242 = vmatprep.mubr.f32.mxu0 0.0
    %243 = vmatmul.mubr.f32.gmra.mrb[0].mxu0 %v171
    %v244 = vpop.f32.mrb[0].mxu0
    %v245 = vadd.f32 %v176, %v244
    %v246 = vpop.f32.mrb[0].mxu0
    %247 = vdwg.mxu0
    %v248 = vadd.f32 %v60, %v245
    %249 = vst [vmem:[#allocation8] sm:$0xff] %v248
    // Predicated region
    $region34: #{tpu_custom_call.1} parent=1 // pred_check
      _
    $region35: #{tpu_custom_call.1} parent=1 // pred_check_branch
      %251 = sbr.rel (0) target = $region37
    $region36: #{tpu_custom_call.1} parent=1 // pred_region
      %s253 = ssub.s32 128, 128
      %254 = vsyncadd [#allocation4], %s253
      %s256 = sshll.u32 [#allocation8], 4
      %s257 = int_to_ptr.vmem [resolvable:$true] %s256
      %259 = dma.vmem_to_hbm [thread:$0]  %s257, 128, %s5, [#allocation4]
    $region37: #{tpu_custom_call.1} parent=1 // pred_fallthru
      _
    // Predicated region
    $region38: #{tpu_custom_call.1} parent=1 // pred_check
      _
    $region39: #{tpu_custom_call.1} parent=1 // pred_check_branch
      %261 = sbr.rel (0) target = $region41
    $region40: #{tpu_custom_call.1} parent=1 // pred_region
      %262 = dma.done [#allocation4], 128
    $region41: #{tpu_custom_call.1} parent=1 // pred_fallthru
      _
    %263 = vsyncpa [#allocation3], 1
    %264 = vsyncpa [#allocation6], 1
    %265 = vsyncpa [#allocation4], 1

</llo_original>
